<compile_context>
chip_gen: v7x
topology: tpu7x:2x2x1
jax: 0.10.0
libtpu: 0.0.40
codegen_flags: <defaults>
</compile_context>

<pallas_src>
import functools

import jax
import jax.numpy as jnp
from jax import lax
from jax.experimental import pallas as pl
from jax.experimental.pallas import tpu as pltpu

CLAMP = 2.0  # FrEIA-style soft clamp on the log-scale


def _inn_kernel(x_ref, w1_ref, b1_ref, w2_ref, b2_ref, y_ref, *, dh, n_blocks):
    """All K coupling blocks for one batch tile; state carried in vregs.

    State convention: state == concat([a, b], axis=-1).  One coupling block:
      x1, x2 = a, b
      h   = relu(x1 @ W1 + b1)
      s|t = h @ W2 + b2                (W2 = [W2_s | W2_t], lane-fused)
      y2  = x2 * exp(CLAMP * tanh(s)) + t
      new state = concat([y2, x1])  ->  new carry = (y2, a)   (swap is free)
    """

    def body(k, carry):
        a, b = carry
        # Subnet MLP on the MXU: bf16 inputs, f32 accumulation.
        x1b = a.astype(jnp.bfloat16)
        h = jnp.dot(x1b, w1_ref[k], preferred_element_type=jnp.float32)
        h = jnp.maximum(h + b1_ref[k], 0.0)
        hb = h.astype(jnp.bfloat16)
        st = jnp.dot(hb, w2_ref[k],
                     preferred_element_type=jnp.float32) + b2_ref[k]
        # Dh is a 128-multiple -> slicing the MXU result at the lane boundary
        # is vreg-aligned and free.
        s = CLAMP * jnp.tanh(st[:, :dh])   # EUP, f32
        t = st[:, dh:]
        y2 = b * jnp.exp(s) + t            # EUP + VPU, f32
        # Half-swap permutation == reorder the carry; no data movement.
        return (y2, a)

    a0 = x_ref[:, :dh]
    b0 = x_ref[:, dh:]
    a, b = lax.fori_loop(0, n_blocks, body, (a0, b0))
    y_ref[:, :dh] = a
    y_ref[:, dh:] = b


def inn_forward_pallas(x, w1s, b1s, w2_s, b2_s, w2_t, b2_t, *, batch_tile=None):
    B, D = x.shape
    K, Dh, H = w1s.shape
    assert D == 2 * Dh
    assert w2_s.shape == (K, H, Dh) and w2_t.shape == (K, H, Dh)
    assert b1s.shape == (K, 1, H)
    assert b2_s.shape == (K, 1, Dh) and b2_t.shape == (K, 1, Dh)
    # Lane/sublane alignment assumptions (unmasked vld/vst, free Dh slice).
    assert Dh % 128 == 0 and H % 128 == 0

    # Big batch tiles: fill the MXU M dim and amortize the (grid-resident)
    # weight fetch; multiple of 16 for bf16 sublane packing.
    tb = batch_tile if batch_tile is not None else min(B, 256)
    assert B % tb == 0 and tb % 8 == 0

    # Fuse the scale/shift heads: one N = 2*Dh matmul, one bias, one DMA slab.
    w2 = jnp.concatenate([w2_s, w2_t], axis=-1)   # (K, H, 2*Dh)
    b2 = jnp.concatenate([b2_s, b2_t], axis=-1)   # (K, 1, 2*Dh)

    wdt = jnp.bfloat16  # weight stream in bf16 (weight-HBM-bound regime)
    w1b = w1s.astype(wdt)
    w2b = w2.astype(wdt)

    # Explicit VMEM budget: 2 buffers for the x/y f32 tiles, the (resident,
    # but still 2x-allocated) bf16 weight stack + f32 biases, plus slack for
    # f32 intermediates.  Capped at 48 MiB so it is valid on v7x (64 MiB
    # physical VMEM) as well as v5e/v6e (128 MiB).
    blk_bytes = tb * D * 4
    w_bytes = (w1b.size + w2b.size) * 2
    bias_bytes = (b1s.size + b2.size) * 4
    est = 4 * blk_bytes + 2 * (w_bytes + bias_bytes) + (4 << 20)
    vmem_limit = int(min(48 << 20, max(32 << 20, int(est * 1.25))))

    kernel = functools.partial(_inn_kernel, dh=Dh, n_blocks=K)

    return pl.pallas_call(
        kernel,
        out_shape=jax.ShapeDtypeStruct((B, D), jnp.float32),
        grid_spec=pltpu.PrefetchScalarGridSpec(
            num_scalar_prefetch=0,
            grid=(B // tb,),  # batch tiles only; K loop lives in the kernel
            in_specs=[
                pl.BlockSpec((tb, D), lambda b: (b, 0)),            # x tile
                # Full weight stacks with constant index_map -> fetched once
                # per core and kept resident across all batch tiles.
                pl.BlockSpec((K, Dh, H), lambda b: (0, 0, 0)),      # W1 stack
                pl.BlockSpec((K, 1, H), lambda b: (0, 0, 0)),       # b1 stack
                pl.BlockSpec((K, H, 2 * Dh), lambda b: (0, 0, 0)),  # W2 (s|t)
                pl.BlockSpec((K, 1, 2 * Dh), lambda b: (0, 0, 0)),  # b2 (s|t)
            ],
            out_specs=pl.BlockSpec((tb, D), lambda b: (b, 0)),
        ),
        compiler_params=pltpu.CompilerParams(
            # Batch tiles shard across TensorCores (v7x megacore).
            dimension_semantics=("parallel",),
            vmem_limit_bytes=vmem_limit,
        ),
    )(x, w1b, b1s, w2b, b2)


def inn_forward_ref(x, w1s, b1s, w2_s, b2_s, w2_t, b2_t):
    """Pure-JAX reference with identical numerics (bf16 MXU, f32 elsewhere)."""
    K, Dh, _ = w1s.shape
    w1b = w1s.astype(jnp.bfloat16)
    w2sb = w2_s.astype(jnp.bfloat16)
    w2tb = w2_t.astype(jnp.bfloat16)
    state = x
    for k in range(K):
        x1, x2 = state[:, :Dh], state[:, Dh:]
        h = jnp.dot(x1.astype(jnp.bfloat16), w1b[k],
                    preferred_element_type=jnp.float32)
        h = jnp.maximum(h + b1s[k], 0.0)
        hb = h.astype(jnp.bfloat16)
        s_raw = jnp.dot(hb, w2sb[k], preferred_element_type=jnp.float32) + b2_s[k]
        t = jnp.dot(hb, w2tb[k], preferred_element_type=jnp.float32) + b2_t[k]
        s = CLAMP * jnp.tanh(s_raw)
        y2 = x2 * jnp.exp(s) + t
        state = jnp.concatenate([y2, x1], axis=-1)
    return state


if __name__ == "__main__":
    # Small but MXU-friendly shapes: Dh = H = 128, batch tile of 128 rows
    # (>= 128 per the perf review), two tiles -> exercises the parallel axis.
    B, D, H, K = 256, 256, 128, 4
    Dh = D // 2
    TB = 128

    key = jax.random.PRNGKey(0)
    kx, kw1, kb1, kw2s, kb2s, kw2t, kb2t = jax.random.split(key, 7)

    x = jax.random.normal(kx, (B, D), dtype=jnp.float32)
    w1s = 0.1 * jax.random.normal(kw1, (K, Dh, H), dtype=jnp.float32)
    b1s = 0.1 * jax.random.normal(kb1, (K, 1, H), dtype=jnp.float32)
    w2_s = 0.1 * jax.random.normal(kw2s, (K, H, Dh), dtype=jnp.float32)
    b2_s = 0.1 * jax.random.normal(kb2s, (K, 1, Dh), dtype=jnp.float32)
    w2_t = 0.1 * jax.random.normal(kw2t, (K, H, Dh), dtype=jnp.float32)
    b2_t = 0.1 * jax.random.normal(kb2t, (K, 1, Dh), dtype=jnp.float32)

    # Even number of coupling blocks.
    y = jax.block_until_ready(
        inn_forward_pallas(x, w1s, b1s, w2_s, b2_s, w2_t, b2_t, batch_tile=TB))
    y_ref = inn_forward_ref(x, w1s, b1s, w2_s, b2_s, w2_t, b2_t)
    assert y.shape == (B, D) and y.dtype == jnp.float32
    assert jnp.allclose(y, y_ref, atol=2e-3, rtol=2e-3), "mismatch (even K)"

    # Odd number of blocks (the vreg-carried swap handles both parities).
    Ko = 3
    y_odd = jax.block_until_ready(
        inn_forward_pallas(x, w1s[:Ko], b1s[:Ko], w2_s[:Ko], b2_s[:Ko],
                           w2_t[:Ko], b2_t[:Ko], batch_tile=TB))
    y_odd_ref = inn_forward_ref(x, w1s[:Ko], b1s[:Ko], w2_s[:Ko], b2_s[:Ko],
                                w2_t[:Ko], b2_t[:Ko])
    assert jnp.allclose(y_odd, y_odd_ref, atol=2e-3, rtol=2e-3), "mismatch (odd K)"

    # TODO(synk): `INNWrapper.inverse` (rev=True path) not implemented here;
    # only the forward pass is required.
    print("KERNEL_OK")
</pallas_src>

<mosaic_0001>
module attributes {stable_mosaic.version = 11 : i64} {
  func.func @_inn_kernel(%arg0: i32, %arg1: memref<128x256xf32, #tpu.memory_space<vmem>>, %arg2: memref<4x128x128xbf16, #tpu.memory_space<vmem>>, %arg3: memref<4x1x128xf32, #tpu.memory_space<vmem>>, %arg4: memref<4x128x256xbf16, #tpu.memory_space<vmem>>, %arg5: memref<4x1x256xf32, #tpu.memory_space<vmem>>, %arg6: memref<128x256xf32, #tpu.memory_space<vmem>>) attributes {dimension_semantics = [#tpu.dimension_semantics<parallel>], iteration_bounds = array<i64: 2>, scalar_prefetch = 0 : i64, scratch_operands = 0 : i64, tpu.core_type = #tpu.core_type<tc>, window_params = [{transform_indices = @transform_0, window_bounds = array<i64: 128, 256>}, {pipeline_mode = #tpu.pipeline_mode<synchronous>, transform_indices = @transform_1, window_bounds = array<i64: 4, 128, 128>}, {pipeline_mode = #tpu.pipeline_mode<synchronous>, transform_indices = @transform_2, window_bounds = array<i64: 4, 1, 128>}, {pipeline_mode = #tpu.pipeline_mode<synchronous>, transform_indices = @transform_3, window_bounds = array<i64: 4, 128, 256>}, {pipeline_mode = #tpu.pipeline_mode<synchronous>, transform_indices = @transform_4, window_bounds = array<i64: 4, 1, 256>}, {transform_indices = @transform_5, window_bounds = array<i64: 128, 256>}]} {
    %c0 = arith.constant 0 : index
    %c0_0 = arith.constant 0 : index
    %0 = vector.load %arg1[%c0, %c0_0] : memref<128x256xf32, #tpu.memory_space<vmem>>, vector<128x128xf32>
    %c0_1 = arith.constant 0 : index
    %c128 = arith.constant 128 : index
    %1 = vector.load %arg1[%c0_1, %c128] : memref<128x256xf32, #tpu.memory_space<vmem>>, vector<128x128xf32>
    %c0_i32 = arith.constant 0 : i32
    %c4_i32 = arith.constant 4 : i32
    %2 = arith.addi %c0_i32, %c4_i32 : i32
    %c1_i32 = arith.constant 1 : i32
    %3:2 = scf.for %arg7 = %c0_i32 to %2 step %c1_i32 iter_args(%arg8 = %0, %arg9 = %1) -> (vector<128x128xf32>, vector<128x128xf32>)  : i32 {
      %6 = arith.truncf %arg8 : vector<128x128xf32> to vector<128x128xbf16>
      %7 = arith.index_cast %arg7 : i32 to index
      %c0_7 = arith.constant 0 : index
      %c0_8 = arith.constant 0 : index
      %8 = vector.load %arg2[%7, %c0_7, %c0_8] : memref<4x128x128xbf16, #tpu.memory_space<vmem>>, vector<1x128x128xbf16>
      %9 = vector.shape_cast %8 : vector<1x128x128xbf16> to vector<128x128xbf16>
      %cst = arith.constant dense<0.000000e+00> : vector<128x128xf32>
      %10 = tpu.matmul %6, %9, %cst {dimension_numbers = #tpu.dot_dimension_numbers<[1], [0], [0], [1], [0, 0, 1, 1], [], []>} : vector<128x128xbf16>, vector<128x128xbf16>, vector<128x128xf32> -> vector<128x128xf32>
      %11 = arith.index_cast %arg7 : i32 to index
      %c0_9 = arith.constant 0 : index
      %c0_10 = arith.constant 0 : index
      %12 = vector.load %arg3[%11, %c0_9, %c0_10] : memref<4x1x128xf32, #tpu.memory_space<vmem>>, vector<1x1x128xf32>
      %13 = vector.shape_cast %12 : vector<1x1x128xf32> to vector<1x128xf32>
      %14 = vector.broadcast %13 : vector<1x128xf32> to vector<128x128xf32>
      %15 = arith.addf %10, %14 : vector<128x128xf32>
      %cst_11 = arith.constant 0.000000e+00 : f32
      %16 = vector.broadcast %cst_11 : f32 to vector<128x128xf32>
      %17 = arith.maximumf %15, %16 : vector<128x128xf32>
      %18 = arith.truncf %17 : vector<128x128xf32> to vector<128x128xbf16>
      %19 = arith.index_cast %arg7 : i32 to index
      %c0_12 = arith.constant 0 : index
      %c0_13 = arith.constant 0 : index
      %20 = vector.load %arg4[%19, %c0_12, %c0_13] : memref<4x128x256xbf16, #tpu.memory_space<vmem>>, vector<1x128x256xbf16>
      %21 = vector.shape_cast %20 : vector<1x128x256xbf16> to vector<128x256xbf16>
      %cst_14 = arith.constant dense<0.000000e+00> : vector<128x256xf32>
      %22 = tpu.matmul %18, %21, %cst_14 {dimension_numbers = #tpu.dot_dimension_numbers<[1], [0], [0], [1], [0, 0, 1, 1], [], []>} : vector<128x128xbf16>, vector<128x256xbf16>, vector<128x256xf32> -> vector<128x256xf32>
      %23 = arith.index_cast %arg7 : i32 to index
      %c0_15 = arith.constant 0 : index
      %c0_16 = arith.constant 0 : index
      %24 = vector.load %arg5[%23, %c0_15, %c0_16] : memref<4x1x256xf32, #tpu.memory_space<vmem>>, vector<1x1x256xf32>
      %25 = vector.shape_cast %24 : vector<1x1x256xf32> to vector<1x256xf32>
      %26 = vector.broadcast %25 : vector<1x256xf32> to vector<128x256xf32>
      %27 = arith.addf %22, %26 : vector<128x256xf32>
      %28 = vector.extract_strided_slice %27 {offsets = [0, 0], sizes = [128, 128], strides = [1, 1]} : vector<128x256xf32> to vector<128x128xf32>
      %29 = math.tanh %28 : vector<128x128xf32>
      %cst_17 = arith.constant 2.000000e+00 : f32
      %30 = vector.broadcast %cst_17 : f32 to vector<128x128xf32>
      %31 = arith.mulf %30, %29 : vector<128x128xf32>
      %32 = vector.extract_strided_slice %27 {offsets = [0, 128], sizes = [128, 128], strides = [1, 1]} : vector<128x256xf32> to vector<128x128xf32>
      %33 = math.exp %31 : vector<128x128xf32>
      %34 = arith.mulf %arg9, %33 : vector<128x128xf32>
      %35 = arith.addf %34, %32 : vector<128x128xf32>
      scf.yield %35, %arg8 : vector<128x128xf32>, vector<128x128xf32>
    }
    %c4_i32_2 = arith.constant 4 : i32
    %c0_3 = arith.constant 0 : index
    %c0_4 = arith.constant 0 : index
    %4 = vector.load %arg6[%c0_3, %c0_4] : memref<128x256xf32, #tpu.memory_space<vmem>>, vector<128x128xf32>
    tpu.vector_store %arg6[%c0_3, %c0_4], %3#0 {strides = array<i32>} : memref<128x256xf32, #tpu.memory_space<vmem>>, vector<128x128xf32>,
    %c0_5 = arith.constant 0 : index
    %c128_6 = arith.constant 128 : index
    %5 = vector.load %arg6[%c0_5, %c128_6] : memref<128x256xf32, #tpu.memory_space<vmem>>, vector<128x128xf32>
    tpu.vector_store %arg6[%c0_5, %c128_6], %3#1 {strides = array<i32>} : memref<128x256xf32, #tpu.memory_space<vmem>>, vector<128x128xf32>,
    return
  }
  func.func @transform_0(%arg0: i32) -> (i32, i32) {
    %c0_i32 = arith.constant 0 : i32
    %c0_i32_0 = arith.constant 0 : i32
    return %arg0, %c0_i32 : i32, i32
  }
  func.func @transform_1(%arg0: i32) -> (i32, i32, i32) {
    %c0_i32 = arith.constant 0 : i32
    %c0_i32_0 = arith.constant 0 : i32
    %c0_i32_1 = arith.constant 0 : i32
    %c0_i32_2 = arith.constant 0 : i32
    return %c0_i32, %c0_i32_0, %c0_i32_1 : i32, i32, i32
  }
  func.func @transform_2(%arg0: i32) -> (i32, i32, i32) {
    %c0_i32 = arith.constant 0 : i32
    %c0_i32_0 = arith.constant 0 : i32
    %c0_i32_1 = arith.constant 0 : i32
    %c0_i32_2 = arith.constant 0 : i32
    return %c0_i32, %c0_i32_0, %c0_i32_1 : i32, i32, i32
  }
  func.func @transform_3(%arg0: i32) -> (i32, i32, i32) {
    %c0_i32 = arith.constant 0 : i32
    %c0_i32_0 = arith.constant 0 : i32
    %c0_i32_1 = arith.constant 0 : i32
    %c0_i32_2 = arith.constant 0 : i32
    return %c0_i32, %c0_i32_0, %c0_i32_1 : i32, i32, i32
  }
  func.func @transform_4(%arg0: i32) -> (i32, i32, i32) {
    %c0_i32 = arith.constant 0 : i32
    %c0_i32_0 = arith.constant 0 : i32
    %c0_i32_1 = arith.constant 0 : i32
    %c0_i32_2 = arith.constant 0 : i32
    return %c0_i32, %c0_i32_0, %c0_i32_1 : i32, i32, i32
  }
  func.func @transform_5(%arg0: i32) -> (i32, i32) {
    %c0_i32 = arith.constant 0 : i32
    %c0_i32_0 = arith.constant 0 : i32
    return %arg0, %c0_i32 : i32, i32
  }
}

</mosaic_0001>

<llo_original>
// kernel: tpu_custom_call.1
$region0: #{tpu_custom_call.1}
  #allocation0 [shape = 'u32[]', space=smem, size = 0x4, offset = 0x4, fixed_abs, tag = 'smem constant byte address 0x4 - core index']
  #allocation1 [shape = 'u32[144,128]{1,0:T(1,128)}', space=vmem, size = 0x12000, scoped, tag = 'internal scratch']
  %s0 = inlined_call_operand.hbm [shape: f32[256,256], index: 0, kind: input, shape index: {}]
  %s1 = inlined_call_operand.hbm [shape: bf16[4,128,128], index: 1, kind: input, shape index: {}]
  %s2 = inlined_call_operand.vmem [shape: f32[4,1,128], index: 2, kind: input, shape index: {}]
  %s3 = inlined_call_operand.hbm [shape: bf16[4,128,256], index: 3, kind: input, shape index: {}]
  %s4 = inlined_call_operand.vmem [shape: f32[4,1,256], index: 4, kind: input, shape index: {}]
  %s5 = inlined_call_operand.hbm [shape: f32[256,256], index: 5, kind: output, shape index: {}]
  %s6 = sld [smem:[#allocation0]]
  $region72: #{tpu_custom_call.1} parent=0
    _
  %s8 = ssub.s32 1, %s6
  %s9 = scalar_select 0, %s8, %s6
  $region1: #{tpu_custom_call.1} parent=0
    #allocation2 [shape = 'u8[262144]{0}', space=vmem, size = 0x40000, scoped, tag = 'input window, operand 0']
    #allocation3 [shape = 's32[2]{0}', space=sflag, size = 0x8, scoped, tag = 'scoped memory for tpu_custom_call.1']
    #allocation4 [shape = 's32[2]{0}', space=sflag, size = 0x8, scoped, tag = 'scoped memory for tpu_custom_call.1']
    #allocation5 [shape = 'u8[131072]{0}', space=vmem, size = 0x20000, scoped, tag = 'input window, operand 1, single buffered']
    #allocation6 [shape = 's32[1]{0}', space=sflag, size = 0x4, scoped, tag = 'scoped memory for tpu_custom_call.1']
    #allocation7 [shape = 'u8[262144]{0}', space=vmem, size = 0x40000, scoped, tag = 'input window, operand 3, single buffered']
    #allocation8 [shape = 'u8[262144]{0}', space=vmem, size = 0x40000, scoped, tag = 'output window, operand 0']
    %10 = vsyncpa [#allocation3], 0
    %s11 = scalar_lea.sflag [#allocation3], 1
    %12 = vsyncpa %s11, 0
    %13 = vsyncpa [#allocation6], 0
    %14 = vsyncpa [#allocation4], 0
    %s15 = scalar_lea.sflag [#allocation4], 1
    %16 = vsyncpa %s15, 0
    loop: start=0, step=1, limit=4
    $region2: #{tpu_custom_call.1} parent=1 // loop_pre_header
      _
    $region3: #{tpu_custom_call.1} parent=1 // loop_header
      %s18 = sphi 0, %s22
      %p19 = scmp.ge.s32.totalorder %s18, 4
      %s28 = sphi 0, %s30
      %s31 = sphi 0, %s28
      %s32 = sphi 0, %s31
      %s48 = sphi 0, %s32
      %s52 = sphi 0, %s52
      %s54 = sphi 0, %s52
      %s55 = sphi 0, %s54
      %s69 = sphi 0, %s55
      %s73 = sphi 0, %s73
      %s75 = sphi 0, %s73
      %s76 = sphi 0, %s75
      %s90 = sphi 0, %s76
      %s94 = sphi 0, %s94
      %s96 = sphi 0, %s94
      %s97 = sphi 0, %s96
      %s111 = sphi 0, %s97
      %s115 = sphi 0, %s115
      %s117 = sphi 0, %s115
      %s118 = sphi 0, %s117
      %s132 = sphi 0, %s118
      %s138 = sphi 0, %s140
      %s141 = sphi 0, %s138
      %s142 = sphi 0, %s141
      %s158 = sphi 0, %s142
    $region4: #{tpu_custom_call.1} parent=1 // loop_header_branch
      %21 = sbr.rel (%p19) target = $region8
    $region5: #{tpu_custom_call.1} parent=1 // loop_body
      %s23 = ssub.s32 %s18, 1
      %s24 = ssub.s32 %s18, 2
      %s25 = sadd.s32 %s18, 1
      %s26 = ssub.s32 %s18, %s25
      %p27 = scmp.eq.s32.totalorder %s26, 0
      %s29 = sadd.s32 %s28, 1
      %s30 = scalar_select %p27, %s28, %s29
      %p33 = pneg %p27
      %p34 = scmp.eq.s32.totalorder %s18, 1
      %p35 = por %p33, %p34
      %p36 = scmp.ne.s32.totalorder %s28, %s31
      %p37 = scmp.eq.s32.totalorder %s18, 0
      %p38 = por %p36, %p37
      %p39 = scmp.ne.s32.totalorder %s28, %s31
      %p40 = scmp.eq.s32.totalorder %s23, 1
      %p41 = por %p39, %p40
      %p42 = scmp.ne.s32.totalorder %s31, %s32
      %p43 = scmp.eq.s32.totalorder %s23, 0
      %p44 = por %p42, %p43
      %p45 = scmp.ne.s32.totalorder %s31, %s32
      %p46 = scmp.eq.s32.totalorder %s24, 1
      %p47 = por %p45, %p46
      %p49 = scmp.ne.s32.totalorder %s32, %s48
      %p50 = scmp.eq.s32.totalorder %s24, 0
      %p51 = por %p49, %p50
      %s53 = sadd.s32 %s52, 1
      %p56 = scmp.eq.s32.totalorder %s18, 1
      %p57 = scmp.ne.s32.totalorder %s52, %s54
      %p58 = scmp.eq.s32.totalorder %s18, 0
      %p59 = por %p57, %p58
      %p60 = scmp.ne.s32.totalorder %s52, %s54
      %p61 = scmp.eq.s32.totalorder %s23, 1
      %p62 = por %p60, %p61
      %p63 = scmp.ne.s32.totalorder %s54, %s55
      %p64 = scmp.eq.s32.totalorder %s23, 0
      %p65 = por %p63, %p64
      %p66 = scmp.ne.s32.totalorder %s54, %s55
      %p67 = scmp.eq.s32.totalorder %s24, 1
      %p68 = por %p66, %p67
      %p70 = scmp.ne.s32.totalorder %s55, %s69
      %p71 = scmp.eq.s32.totalorder %s24, 0
      %p72 = por %p70, %p71
      %s74 = sadd.s32 %s73, 1
      %p77 = scmp.eq.s32.totalorder %s18, 1
      %p78 = scmp.ne.s32.totalorder %s73, %s75
      %p79 = scmp.eq.s32.totalorder %s18, 0
      %p80 = por %p78, %p79
      %p81 = scmp.ne.s32.totalorder %s73, %s75
      %p82 = scmp.eq.s32.totalorder %s23, 1
      %p83 = por %p81, %p82
      %p84 = scmp.ne.s32.totalorder %s75, %s76
      %p85 = scmp.eq.s32.totalorder %s23, 0
      %p86 = por %p84, %p85
      %p87 = scmp.ne.s32.totalorder %s75, %s76
      %p88 = scmp.eq.s32.totalorder %s24, 1
      %p89 = por %p87, %p88
      %p91 = scmp.ne.s32.totalorder %s76, %s90
      %p92 = scmp.eq.s32.totalorder %s24, 0
      %p93 = por %p91, %p92
      %s95 = sadd.s32 %s94, 1
      %p98 = scmp.eq.s32.totalorder %s18, 1
      %p99 = scmp.ne.s32.totalorder %s94, %s96
      %p100 = scmp.eq.s32.totalorder %s18, 0
      %p101 = por %p99, %p100
      %p102 = scmp.ne.s32.totalorder %s94, %s96
      %p103 = scmp.eq.s32.totalorder %s23, 1
      %p104 = por %p102, %p103
      %p105 = scmp.ne.s32.totalorder %s96, %s97
      %p106 = scmp.eq.s32.totalorder %s23, 0
      %p107 = por %p105, %p106
      %p108 = scmp.ne.s32.totalorder %s96, %s97
      %p109 = scmp.eq.s32.totalorder %s24, 1
      %p110 = por %p108, %p109
      %p112 = scmp.ne.s32.totalorder %s97, %s111
      %p113 = scmp.eq.s32.totalorder %s24, 0
      %p114 = por %p112, %p113
      %s116 = sadd.s32 %s115, 1
      %p119 = scmp.eq.s32.totalorder %s18, 1
      %p120 = scmp.ne.s32.totalorder %s115, %s117
      %p121 = scmp.eq.s32.totalorder %s18, 0
      %p122 = por %p120, %p121
      %p123 = scmp.ne.s32.totalorder %s115, %s117
      %p124 = scmp.eq.s32.totalorder %s23, 1
      %p125 = por %p123, %p124
      %p126 = scmp.ne.s32.totalorder %s117, %s118
      %p127 = scmp.eq.s32.totalorder %s23, 0
      %p128 = por %p126, %p127
      %p129 = scmp.ne.s32.totalorder %s117, %s118
      %p130 = scmp.eq.s32.totalorder %s24, 1
      %p131 = por %p129, %p130
      %p133 = scmp.ne.s32.totalorder %s118, %s132
      %p134 = scmp.eq.s32.totalorder %s24, 0
      %p135 = por %p133, %p134
      %s136 = ssub.s32 %s18, %s25
      %p137 = scmp.eq.s32.totalorder %s136, 0
      %s139 = sadd.s32 %s138, 1
      %s140 = scalar_select %p137, %s138, %s139
      %p143 = pneg %p137
      %p144 = scmp.eq.s32.totalorder %s18, 1
      %p145 = por %p143, %p144
      %p146 = scmp.ne.s32.totalorder %s138, %s141
      %p147 = scmp.eq.s32.totalorder %s18, 0
      %p148 = por %p146, %p147
      %p149 = scmp.ne.s32.totalorder %s138, %s141
      %p150 = scmp.eq.s32.totalorder %s23, 1
      %p151 = por %p149, %p150
      %p152 = scmp.ne.s32.totalorder %s141, %s142
      %p153 = scmp.eq.s32.totalorder %s23, 0
      %p154 = por %p152, %p153
      %p155 = scmp.ne.s32.totalorder %s141, %s142
      %p156 = scmp.eq.s32.totalorder %s24, 1
      %p157 = por %p155, %p156
      %p159 = scmp.ne.s32.totalorder %s142, %s158
      %p160 = scmp.eq.s32.totalorder %s24, 0
      %p161 = por %p159, %p160
      %p162 = scmp.le.s32.totalorder 1, %s18
      %p163 = scmp.lt.s32.totalorder %s18, 3
      %p164 = pnand %p162, %p163
      %p165 = pneg %p164
      // Predicated region
      $region9: #{tpu_custom_call.1} parent=5 // pred_check
        _
      $region10: #{tpu_custom_call.1} parent=5 // pred_check_branch
        %167 = sbr.rel (%p164) target = $region12
      $region11: #{tpu_custom_call.1} parent=5 // pred_region
        %s168 = ssub.s32 %s18, 1
        // Predicated region
        $region13: #{tpu_custom_call.1} parent=11 // pred_check
          %p169 = pneg %p65
        $region14: #{tpu_custom_call.1} parent=11 // pred_check_branch
          %171 = sbr.rel (%p169) target = $region16
        $region15: #{tpu_custom_call.1} parent=11 // pred_region
          %s173 = ssub.s32 4096, 4096
          %174 = vsyncadd [#allocation6], %s173
          %s175 = sshll.u32 [#allocation5], 4
          %s176 = int_to_ptr.vmem [resolvable:$true] %s175
          %181 = dma.hbm_to_vmem [thread:$0]  %s1, 4096, %s176, [#allocation6], 64, 64, 4
        $region16: #{tpu_custom_call.1} parent=11 // pred_fallthru
          _
        // Predicated region
        $region17: #{tpu_custom_call.1} parent=11 // pred_check
          %p182 = pneg %p86
        $region18: #{tpu_custom_call.1} parent=11 // pred_check_branch
          %184 = sbr.rel (%p182) target = $region20
        $region19: #{tpu_custom_call.1} parent=11 // pred_region
          _
        $region20: #{tpu_custom_call.1} parent=11 // pred_fallthru
          _
        // Predicated region
        $region21: #{tpu_custom_call.1} parent=11 // pred_check
          %p185 = pneg %p107
        $region22: #{tpu_custom_call.1} parent=11 // pred_check_branch
          %187 = sbr.rel (%p185) target = $region24
        $region23: #{tpu_custom_call.1} parent=11 // pred_region
          %s189 = ssub.s32 8192, 8192
          %190 = vsyncadd [#allocation6], %s189
          %s191 = sshll.u32 [#allocation7], 4
          %s192 = int_to_ptr.vmem [resolvable:$true] %s191
          %197 = dma.hbm_to_vmem [thread:$0]  %s3, 8192, %s192, [#allocation6], 128, 128, 8
        $region24: #{tpu_custom_call.1} parent=11 // pred_fallthru
          _
        // Predicated region
        $region25: #{tpu_custom_call.1} parent=11 // pred_check
          %p198 = pneg %p128
        $region26: #{tpu_custom_call.1} parent=11 // pred_check_branch
          %200 = sbr.rel (%p198) target = $region28
        $region27: #{tpu_custom_call.1} parent=11 // pred_region
          _
        $region28: #{tpu_custom_call.1} parent=11 // pred_fallthru
          _
      $region12: #{tpu_custom_call.1} parent=5 // pred_fallthru
        _
      %p201 = scmp.lt.s32.totalorder %s18, 2
      // Predicated region
      $region29: #{tpu_custom_call.1} parent=5 // pred_check
        %p202 = pneg %p201
      $region30: #{tpu_custom_call.1} parent=5 // pred_check_branch
        %204 = sbr.rel (%p202) target = $region32
      $region31: #{tpu_custom_call.1} parent=5 // pred_region
        // Predicated region
        $region33: #{tpu_custom_call.1} parent=31 // pred_check
          %p205 = pneg %p38
        $region34: #{tpu_custom_call.1} parent=31 // pred_check_branch
          %207 = sbr.rel (%p205) target = $region36
        $region35: #{tpu_custom_call.1} parent=31 // pred_region
          %s208 = sand.u32 %s28, 1
          %s209 = scalar_lea.sflag [#allocation3], %s208
          %s210 = sand.u32 %s28, 1
          %s211 = smul.addr %s210, 256
          %s212 = scalar_lea.vmem [#allocation2], %s211
          %s213 = smul.u32 16, %s18
          %s215 = ssub.s32 4096, 4096
          %216 = vsyncadd %s209, %s215
          %s217 = smul.addr %s213, 2
          %s218 = smul.addr %s217, 128
          %s219 = scalar_lea.hbm %s0, %s218
          %s220 = sshll.u32 %s212, 4
          %s221 = int_to_ptr.vmem [resolvable:$true] %s220
          %226 = dma.hbm_to_vmem [thread:$0]  %s219, 4096, %s221, %s209, 256, 256, 16
        $region36: #{tpu_custom_call.1} parent=31 // pred_fallthru
          _
      $region32: #{tpu_custom_call.1} parent=5 // pred_fallthru
        _
      %p227 = scmp.le.s32.totalorder 1, %s18
      %p228 = scmp.lt.s32.totalorder %s18, 3
      %p229 = pnand %p227, %p228
      %p230 = pneg %p229
      // Predicated region
      $region37: #{tpu_custom_call.1} parent=5 // pred_check
        _
      $region38: #{tpu_custom_call.1} parent=5 // pred_check_branch
        %232 = sbr.rel (%p229) target = $region40
      $region39: #{tpu_custom_call.1} parent=5 // pred_region
        %s233 = ssub.s32 %s18, 1
        %s234 = sand.u32 %s31, 1
        %s235 = scalar_lea.sflag [#allocation3], %s234
        %s236 = sand.u32 %s31, 1
        %s237 = smul.addr %s236, 256
        %s238 = scalar_lea.vmem [#allocation2], %s237
        // Predicated region
        $region41: #{tpu_custom_call.1} parent=39 // pred_check
          %p239 = pneg %p44
        $region42: #{tpu_custom_call.1} parent=39 // pred_check_branch
          %241 = sbr.rel (%p239) target = $region44
        $region43: #{tpu_custom_call.1} parent=39 // pred_region
          %242 = dma.done %s235, 4096
        $region44: #{tpu_custom_call.1} parent=39 // pred_fallthru
          _
        // Predicated region
        $region45: #{tpu_custom_call.1} parent=39 // pred_check
          %p243 = pneg %p65
        $region46: #{tpu_custom_call.1} parent=39 // pred_check_branch
          %245 = sbr.rel (%p243) target = $region48
        $region47: #{tpu_custom_call.1} parent=39 // pred_region
          %246 = dma.done [#allocation6], 4096
        $region48: #{tpu_custom_call.1} parent=39 // pred_fallthru
          _
        // Predicated region
        $region49: #{tpu_custom_call.1} parent=39 // pred_check
          %p247 = pneg %p107
        $region50: #{tpu_custom_call.1} parent=39 // pred_check_branch
          %249 = sbr.rel (%p247) target = $region52
        $region51: #{tpu_custom_call.1} parent=39 // pred_region
          %250 = dma.done [#allocation6], 8192
        $region52: #{tpu_custom_call.1} parent=39 // pred_fallthru
          _
        %s251 = sand.u32 %s31, 1
        %s252 = scalar_lea.sflag [#allocation3], %s251
        %s253 = sand.u32 %s31, 1
        %s254 = smul.addr %s253, 256
        %s255 = scalar_lea.vmem [#allocation2], %s254
        %p256 = pneg %p44
        %p257 = pneg %p41
        %p258 = pneg %p65
        %p259 = pneg %p62
        %p260 = pneg %p86
        %p261 = pneg %p83
        %p262 = pneg %p107
        %p263 = pneg %p104
        %p264 = pneg %p128
        %p265 = pneg %p125
        %p266 = pneg %p154
        %p267 = pneg %p151
        %s268 = sand.u32 %s141, 1
        %s269 = scalar_lea.sflag [#allocation4], %s268
        %s270 = sand.u32 %s141, 1
        %s271 = smul.addr %s270, 256
        %s272 = scalar_lea.vmem [#allocation8], %s271
        %s273 = smul.u32 16, %s23
        %s274 = smul.u32 16, %s23
        %v276 = vld [vmem:[%s238] sm:$0xff]
        %v277 = vld [vmem:[%s238 + $0x10] sm:$0xff]
        %v278 = vld [vmem:[%s238 + $0x20] sm:$0xff]
        %v279 = vld [vmem:[%s238 + $0x30] sm:$0xff]
        %v280 = vld [vmem:[%s238 + $0x40] sm:$0xff]
        %v281 = vld [vmem:[%s238 + $0x50] sm:$0xff]
        %v282 = vld [vmem:[%s238 + $0x60] sm:$0xff]
        %v283 = vld [vmem:[%s238 + $0x70] sm:$0xff]
        %v284 = vld [vmem:[%s238 + $0x80] sm:$0xff]
        %v285 = vld [vmem:[%s238 + $0x90] sm:$0xff]
        %v286 = vld [vmem:[%s238 + $0xa0] sm:$0xff]
        %v287 = vld [vmem:[%s238 + $0xb0] sm:$0xff]
        %v288 = vld [vmem:[%s238 + $0xc0] sm:$0xff]
        %v289 = vld [vmem:[%s238 + $0xd0] sm:$0xff]
        %v290 = vld [vmem:[%s238 + $0xe0] sm:$0xff]
        %v291 = vld [vmem:[%s238 + $0xf0] sm:$0xff]
        %v292 = vld [vmem:[%s238 + $0x8] sm:$0xff]
        %v293 = vld [vmem:[%s238 + $0x18] sm:$0xff]
        %v294 = vld [vmem:[%s238 + $0x28] sm:$0xff]
        %v295 = vld [vmem:[%s238 + $0x38] sm:$0xff]
        %v296 = vld [vmem:[%s238 + $0x48] sm:$0xff]
        %v297 = vld [vmem:[%s238 + $0x58] sm:$0xff]
        %v298 = vld [vmem:[%s238 + $0x68] sm:$0xff]
        %v299 = vld [vmem:[%s238 + $0x78] sm:$0xff]
        %v300 = vld [vmem:[%s238 + $0x88] sm:$0xff]
        %v301 = vld [vmem:[%s238 + $0x98] sm:$0xff]
        %v302 = vld [vmem:[%s238 + $0xa8] sm:$0xff]
        %v303 = vld [vmem:[%s238 + $0xb8] sm:$0xff]
        %v304 = vld [vmem:[%s238 + $0xc8] sm:$0xff]
        %v305 = vld [vmem:[%s238 + $0xd8] sm:$0xff]
        %v306 = vld [vmem:[%s238 + $0xe8] sm:$0xff]
        %v307 = vld [vmem:[%s238 + $0xf8] sm:$0xff]
        loop: start=0, step=1, limit=4
        $region53: #{tpu_custom_call.1} parent=39 // loop_pre_header
          _
        $region54: #{tpu_custom_call.1} parent=39 // loop_header
          %s309 = sphi 0, %s313
          %p310 = scmp.ge.s32.totalorder %s309, 4
          %v314 = vphi %v276, %v856
          %v315 = vphi %v277, %v857
          %v316 = vphi %v278, %v858
          %v317 = vphi %v279, %v859
          %v318 = vphi %v280, %v860
          %v319 = vphi %v281, %v861
          %v320 = vphi %v282, %v862
          %v321 = vphi %v283, %v863
          %v322 = vphi %v284, %v864
          %v323 = vphi %v285, %v865
          %v324 = vphi %v286, %v866
          %v325 = vphi %v287, %v867
          %v326 = vphi %v288, %v868
          %v327 = vphi %v289, %v869
          %v328 = vphi %v290, %v870
          %v329 = vphi %v291, %v871
          %v330 = vphi %v292, %v314
          %v331 = vphi %v293, %v315
          %v332 = vphi %v294, %v316
          %v333 = vphi %v295, %v317
          %v334 = vphi %v296, %v318
          %v335 = vphi %v297, %v319
          %v336 = vphi %v298, %v320
          %v337 = vphi %v299, %v321
          %v338 = vphi %v300, %v322
          %v339 = vphi %v301, %v323
          %v340 = vphi %v302, %v324
          %v341 = vphi %v303, %v325
          %v342 = vphi %v304, %v326
          %v343 = vphi %v305, %v327
          %v344 = vphi %v306, %v328
          %v345 = vphi %v307, %v329
        $region55: #{tpu_custom_call.1} parent=39 // loop_header_branch
          %312 = sbr.rel (%p310) target = $region59
        $region56: #{tpu_custom_call.1} parent=39 // loop_body
          %v346 = vpack.c.bf16 %v315, %v314
          %v347 = vpack.c.bf16 %v317, %v316
          %v348 = vpack.c.bf16 %v319, %v318
          %v349 = vpack.c.bf16 %v321, %v320
          %v350 = vpack.c.bf16 %v323, %v322
          %v351 = vpack.c.bf16 %v325, %v324
          %v352 = vpack.c.bf16 %v327, %v326
          %v353 = vpack.c.bf16 %v329, %v328
          %s354 = smul.u32 %s309, 16
          %s355 = smul.addr %s354, 4
          %s356 = scalar_lea.vmem [#allocation5], %s355
          %v357 = vld [vmem:[%s356] sm:$0xf]
          %v358 = vld [vmem:[%s356 + $0x4] sm:$0xf]
          %v359 = vld [vmem:[%s356 + $0x8] sm:$0xf]
          %v360 = vld [vmem:[%s356 + $0xc] sm:$0xf]
          %v361 = vld [vmem:[%s356 + $0x10] sm:$0xf]
          %v362 = vld [vmem:[%s356 + $0x14] sm:$0xf]
          %v363 = vld [vmem:[%s356 + $0x18] sm:$0xf]
          %v364 = vld [vmem:[%s356 + $0x1c] sm:$0xf]
          %v365 = vld [vmem:[%s356 + $0x20] sm:$0xf]
          %v366 = vld [vmem:[%s356 + $0x24] sm:$0xf]
          %v367 = vld [vmem:[%s356 + $0x28] sm:$0xf]
          %v368 = vld [vmem:[%s356 + $0x2c] sm:$0xf]
          %v369 = vld [vmem:[%s356 + $0x30] sm:$0xf]
          %v370 = vld [vmem:[%s356 + $0x34] sm:$0xf]
          %v371 = vld [vmem:[%s356 + $0x38] sm:$0xf]
          %v372 = vld [vmem:[%s356 + $0x3c] sm:$0xf]
          %s373 = scalar_lea.vmem %s2, %s309
          %v374 = vld [vmem:[%s373] sm:$0x1]
          %v376 = vlaneseq
          %v377 = vshrl.u32 %v376, 7
          %v378 = vsub.s32 0, %v377
          %v379 = vrot.slane %v374, %v378
          %v397 = vunpack.c.l.b16 %v357
          %v398 = vunpack.c.l.b16 %v358
          %v399 = vunpack.c.l.b16 %v359
          %v400 = vunpack.c.l.b16 %v360
          %v401 = vunpack.c.l.b16 %v361
          %v402 = vunpack.c.l.b16 %v362
          %v403 = vunpack.c.l.b16 %v363
          %v404 = vunpack.c.l.b16 %v364
          %v405 = vunpack.c.l.b16 %v365
          %v406 = vunpack.c.l.b16 %v366
          %v407 = vunpack.c.l.b16 %v367
          %v408 = vunpack.c.l.b16 %v368
          %v409 = vunpack.c.l.b16 %v369
          %v410 = vunpack.c.l.b16 %v370
          %v411 = vunpack.c.l.b16 %v371
          %v412 = vunpack.c.l.b16 %v372
          %v413 = vpack.c.b16 %v398, %v397
          %v414 = vpack.c.b16 %v400, %v399
          %v415 = vpack.c.b16 %v402, %v401
          %v416 = vpack.c.b16 %v404, %v403
          %v417 = vpack.c.b16 %v406, %v405
          %v418 = vpack.c.b16 %v408, %v407
          %v419 = vpack.c.b16 %v410, %v409
          %v420 = vpack.c.b16 %v412, %v411
          %429 = vmatprep.subr.bf16.mxu0 0
          %430 = vmatpush1.bf16.msra.mxu0 %v413
          %431 = vmatprep.subr.bf16.mxu0 0
          %432 = vmatpush1.bf16.msra.mxu0 %v414
          %433 = vmatprep.subr.bf16.mxu0 0
          %434 = vmatpush1.bf16.msra.mxu0 %v415
          %435 = vmatprep.subr.bf16.mxu0 0
          %436 = vmatpush1.bf16.msra.mxu0 %v416
          %437 = vmatprep.subr.bf16.mxu0 0
          %438 = vmatpush1.bf16.msra.mxu0 %v417
          %439 = vmatprep.subr.bf16.mxu0 0
          %440 = vmatpush1.bf16.msra.mxu0 %v418
          %441 = vmatprep.subr.bf16.mxu0 0
          %442 = vmatpush1.bf16.msra.mxu0 %v419
          %443 = vmatprep.subr.bf16.mxu0 0
          %444 = vmatpush1.bf16.msra.mxu0 %v420
          %445 = vmatprep.subr.bf16.mxu0 0
          %446 = vmatpush1.bf16.msra.mxu0 0
          %447 = vmatprep.subr.bf16.mxu0 0
          %448 = vmatpush1.bf16.msra.mxu0 0
          %449 = vmatprep.subr.bf16.mxu0 0
          %450 = vmatpush1.bf16.msra.mxu0 0
          %451 = vmatprep.subr.bf16.mxu0 0
          %452 = vmatpush1.bf16.msra.mxu0 0
          %453 = vmatprep.subr.bf16.mxu0 0
          %454 = vmatpush1.bf16.msra.mxu0 0
          %455 = vmatprep.subr.bf16.mxu0 0
          %456 = vmatpush1.bf16.msra.mxu0 0
          %457 = vmatprep.subr.bf16.mxu0 0
          %458 = vmatpush1.bf16.msra.mxu0 0
          %459 = vmatprep.subr.bf16.mxu0 0
          %460 = vmatpush1.bf16.msra.mxu0 0
          %461 = vmatprep.mubr.bf16.mxu0 0
          %462 = vmatmul.mubr.bf16.gmra.mrb[0].mxu0 %v346
          %v463 = vpop.f32.mrb[0].mxu0
          %v464 = vadd.f32 %v379, %v463
          %v465 = vpop.f32.mrb[0].mxu0
          %v466 = vpop.f32.mrb[0].mxu0
          %v467 = vadd.f32 %v379, %v466
          %v468 = vpop.f32.mrb[0].mxu0
          %469 = vmatprep.mubr.bf16.mxu0 0
          %470 = vmatmul.mubr.bf16.gmra.mrb[0].mxu0 %v347
          %v471 = vpop.f32.mrb[0].mxu0
          %v472 = vadd.f32 %v379, %v471
          %v473 = vpop.f32.mrb[0].mxu0
          %v474 = vpop.f32.mrb[0].mxu0
          %v475 = vadd.f32 %v379, %v474
          %v476 = vpop.f32.mrb[0].mxu0
          %477 = vmatprep.mubr.bf16.mxu0 0
          %478 = vmatmul.mubr.bf16.gmra.mrb[0].mxu0 %v348
          %v479 = vpop.f32.mrb[0].mxu0
          %v480 = vadd.f32 %v379, %v479
          %v481 = vpop.f32.mrb[0].mxu0
          %v482 = vpop.f32.mrb[0].mxu0
          %v483 = vadd.f32 %v379, %v482
          %v484 = vpop.f32.mrb[0].mxu0
          %485 = vmatprep.mubr.bf16.mxu0 0
          %486 = vmatmul.mubr.bf16.gmra.mrb[0].mxu0 %v349
          %v487 = vpop.f32.mrb[0].mxu0
          %v488 = vadd.f32 %v379, %v487
          %v489 = vpop.f32.mrb[0].mxu0
          %v490 = vpop.f32.mrb[0].mxu0
          %v491 = vadd.f32 %v379, %v490
          %v492 = vpop.f32.mrb[0].mxu0
          %493 = vmatprep.mubr.bf16.mxu0 0
          %494 = vmatmul.mubr.bf16.gmra.mrb[0].mxu0 %v350
          %v495 = vpop.f32.mrb[0].mxu0
          %v496 = vadd.f32 %v379, %v495
          %v497 = vpop.f32.mrb[0].mxu0
          %v498 = vpop.f32.mrb[0].mxu0
          %v499 = vadd.f32 %v379, %v498
          %v500 = vpop.f32.mrb[0].mxu0
          %501 = vmatprep.mubr.bf16.mxu0 0
          %502 = vmatmul.mubr.bf16.gmra.mrb[0].mxu0 %v351
          %v503 = vpop.f32.mrb[0].mxu0
          %v504 = vadd.f32 %v379, %v503
          %v505 = vpop.f32.mrb[0].mxu0
          %v506 = vpop.f32.mrb[0].mxu0
          %v507 = vadd.f32 %v379, %v506
          %v508 = vpop.f32.mrb[0].mxu0
          %509 = vmatprep.mubr.bf16.mxu0 0
          %510 = vmatmul.mubr.bf16.gmra.mrb[0].mxu0 %v352
          %v511 = vpop.f32.mrb[0].mxu0
          %v512 = vadd.f32 %v379, %v511
          %v513 = vpop.f32.mrb[0].mxu0
          %v514 = vpop.f32.mrb[0].mxu0
          %v515 = vadd.f32 %v379, %v514
          %v516 = vpop.f32.mrb[0].mxu0
          %517 = vmatprep.mubr.bf16.mxu0 0
          %518 = vmatmul.mubr.bf16.gmra.mrb[0].mxu0 %v353
          %v519 = vpop.f32.mrb[0].mxu0
          %v520 = vadd.f32 %v379, %v519
          %v521 = vpop.f32.mrb[0].mxu0
          %v522 = vpop.f32.mrb[0].mxu0
          %v523 = vadd.f32 %v379, %v522
          %v524 = vpop.f32.mrb[0].mxu0
          %525 = vdwg.mxu0
          %v526 = vmax.f32 %v464, 0.0
          %v527 = vmax.f32 %v467, 0.0
          %v528 = vmax.f32 %v472, 0.0
          %v529 = vmax.f32 %v475, 0.0
          %v530 = vmax.f32 %v480, 0.0
          %v531 = vmax.f32 %v483, 0.0
          %v532 = vmax.f32 %v488, 0.0
          %v533 = vmax.f32 %v491, 0.0
          %v534 = vmax.f32 %v496, 0.0
          %v535 = vmax.f32 %v499, 0.0
          %v536 = vmax.f32 %v504, 0.0
          %v537 = vmax.f32 %v507, 0.0
          %v538 = vmax.f32 %v512, 0.0
          %v539 = vmax.f32 %v515, 0.0
          %v540 = vmax.f32 %v520, 0.0
          %v541 = vmax.f32 %v523, 0.0
          %v542 = vpack.c.bf16 %v527, %v526
          %v543 = vpack.c.bf16 %v529, %v528
          %v544 = vpack.c.bf16 %v531, %v530
          %v545 = vpack.c.bf16 %v533, %v532
          %v546 = vpack.c.bf16 %v535, %v534
          %v547 = vpack.c.bf16 %v537, %v536
          %v548 = vpack.c.bf16 %v539, %v538
          %v549 = vpack.c.bf16 %v541, %v540
          %s550 = smul.u32 %s309, 32
          %s551 = smul.addr %s550, 4
          %s552 = scalar_lea.vmem [#allocation7], %s551
          %v553 = vld [vmem:[%s552] sm:$0xff]
          %v554 = vld [vmem:[%s552 + $0x8] sm:$0xff]
          %v555 = vld [vmem:[%s552 + $0x10] sm:$0xff]
          %v556 = vld [vmem:[%s552 + $0x18] sm:$0xff]
          %v557 = vld [vmem:[%s552 + $0x20] sm:$0xff]
          %v558 = vld [vmem:[%s552 + $0x28] sm:$0xff]
          %v559 = vld [vmem:[%s552 + $0x30] sm:$0xff]
          %v560 = vld [vmem:[%s552 + $0x38] sm:$0xff]
          %v561 = vld [vmem:[%s552 + $0x40] sm:$0xff]
          %v562 = vld [vmem:[%s552 + $0x48] sm:$0xff]
          %v563 = vld [vmem:[%s552 + $0x50] sm:$0xff]
          %v564 = vld [vmem:[%s552 + $0x58] sm:$0xff]
          %v565 = vld [vmem:[%s552 + $0x60] sm:$0xff]
          %v566 = vld [vmem:[%s552 + $0x68] sm:$0xff]
          %v567 = vld [vmem:[%s552 + $0x70] sm:$0xff]
          %v568 = vld [vmem:[%s552 + $0x78] sm:$0xff]
          %s569 = smul.u32 %s309, 2
          %s570 = scalar_lea.vmem %s4, %s569
          %v571 = vld [vmem:[%s570] sm:$0x3]
          %v573 = vlaneseq
          %v574 = vshrl.u32 %v573, 7
          %v575 = vsub.s32 0, %v574
          %v576 = vrot.slane %v571, %v575
          %v577 = vlaneseq
          %v578 = vshrl.u32 %v577, 7
          %v579 = vsub.s32 1, %v578
          %v580 = vrot.slane %v571, %v579
          %v599 = vunpack.c.l.b16 %v553
          %v600 = vunpack.c.h.b16 %v553
          %v601 = vunpack.c.l.b16 %v554
          %v602 = vunpack.c.h.b16 %v554
          %v603 = vunpack.c.l.b16 %v555
          %v604 = vunpack.c.h.b16 %v555
          %v605 = vunpack.c.l.b16 %v556
          %v606 = vunpack.c.h.b16 %v556
          %v607 = vunpack.c.l.b16 %v557
          %v608 = vunpack.c.h.b16 %v557
          %v609 = vunpack.c.l.b16 %v558
          %v610 = vunpack.c.h.b16 %v558
          %v611 = vunpack.c.l.b16 %v559
          %v612 = vunpack.c.h.b16 %v559
          %v613 = vunpack.c.l.b16 %v560
          %v614 = vunpack.c.h.b16 %v560
          %v615 = vunpack.c.l.b16 %v561
          %v616 = vunpack.c.h.b16 %v561
          %v617 = vunpack.c.l.b16 %v562
          %v618 = vunpack.c.h.b16 %v562
          %v619 = vunpack.c.l.b16 %v563
          %v620 = vunpack.c.h.b16 %v563
          %v621 = vunpack.c.l.b16 %v564
          %v622 = vunpack.c.h.b16 %v564
          %v623 = vunpack.c.l.b16 %v565
          %v624 = vunpack.c.h.b16 %v565
          %v625 = vunpack.c.l.b16 %v566
          %v626 = vunpack.c.h.b16 %v566
          %v627 = vunpack.c.l.b16 %v567
          %v628 = vunpack.c.h.b16 %v567
          %v629 = vunpack.c.l.b16 %v568
          %v630 = vunpack.c.h.b16 %v568
          %v631 = vpack.c.b16 %v601, %v599
          %v632 = vpack.c.b16 %v602, %v600
          %v633 = vpack.c.b16 %v605, %v603
          %v634 = vpack.c.b16 %v606, %v604
          %v635 = vpack.c.b16 %v609, %v607
          %v636 = vpack.c.b16 %v610, %v608
          %v637 = vpack.c.b16 %v613, %v611
          %v638 = vpack.c.b16 %v614, %v612
          %v639 = vpack.c.b16 %v617, %v615
          %v640 = vpack.c.b16 %v618, %v616
          %v641 = vpack.c.b16 %v621, %v619
          %v642 = vpack.c.b16 %v622, %v620
          %v643 = vpack.c.b16 %v625, %v623
          %v644 = vpack.c.b16 %v626, %v624
          %v645 = vpack.c.b16 %v629, %v627
          %v646 = vpack.c.b16 %v630, %v628
          %663 = vmatprep.subr.bf16.mxu0 %v632
          %664 = vmatpush1.bf16.msra.mxu0 %v631
          %665 = vmatprep.subr.bf16.mxu0 %v634
          %666 = vmatpush1.bf16.msra.mxu0 %v633
          %667 = vmatprep.subr.bf16.mxu0 %v636
          %668 = vmatpush1.bf16.msra.mxu0 %v635
          %669 = vmatprep.subr.bf16.mxu0 %v638
          %670 = vmatpush1.bf16.msra.mxu0 %v637
          %671 = vmatprep.subr.bf16.mxu0 %v640
          %672 = vmatpush1.bf16.msra.mxu0 %v639
          %673 = vmatprep.subr.bf16.mxu0 %v642
          %674 = vmatpush1.bf16.msra.mxu0 %v641
          %675 = vmatprep.subr.bf16.mxu0 %v644
          %676 = vmatpush1.bf16.msra.mxu0 %v643
          %677 = vmatprep.subr.bf16.mxu0 %v646
          %678 = vmatpush1.bf16.msra.mxu0 %v645
          %679 = vmatprep.subr.bf16.mxu0 0
          %680 = vmatpush1.bf16.msra.mxu0 0
          %681 = vmatprep.subr.bf16.mxu0 0
          %682 = vmatpush1.bf16.msra.mxu0 0
          %683 = vmatprep.subr.bf16.mxu0 0
          %684 = vmatpush1.bf16.msra.mxu0 0
          %685 = vmatprep.subr.bf16.mxu0 0
          %686 = vmatpush1.bf16.msra.mxu0 0
          %687 = vmatprep.subr.bf16.mxu0 0
          %688 = vmatpush1.bf16.msra.mxu0 0
          %689 = vmatprep.subr.bf16.mxu0 0
          %690 = vmatpush1.bf16.msra.mxu0 0
          %691 = vmatprep.subr.bf16.mxu0 0
          %692 = vmatpush1.bf16.msra.mxu0 0
          %693 = vmatprep.subr.bf16.mxu0 0
          %694 = vmatpush1.bf16.msra.mxu0 0
          %695 = vmatprep.mubr.bf16.mxu0 0
          %696 = vmatmul.mubr.bf16.gmra.mrb[0].mxu0 %v542
          %v697 = vpop.f32.mrb[0].mxu0
          %v698 = vadd.f32 %v576, %v697
          %v699 = vpop.f32.mrb[0].mxu0
          %v700 = vadd.f32 %v580, %v699
          %v701 = vpop.f32.mrb[0].mxu0
          %v702 = vadd.f32 %v576, %v701
          %v703 = vpop.f32.mrb[0].mxu0
          %v704 = vadd.f32 %v580, %v703
          %705 = vmatprep.mubr.bf16.mxu0 0
          %706 = vmatmul.mubr.bf16.gmra.mrb[0].mxu0 %v543
          %v707 = vpop.f32.mrb[0].mxu0
          %v708 = vadd.f32 %v576, %v707
          %v709 = vpop.f32.mrb[0].mxu0
          %v710 = vadd.f32 %v580, %v709
          %v711 = vpop.f32.mrb[0].mxu0
          %v712 = vadd.f32 %v576, %v711
          %v713 = vpop.f32.mrb[0].mxu0
          %v714 = vadd.f32 %v580, %v713
          %715 = vmatprep.mubr.bf16.mxu0 0
          %716 = vmatmul.mubr.bf16.gmra.mrb[0].mxu0 %v544
          %v717 = vpop.f32.mrb[0].mxu0
          %v718 = vadd.f32 %v576, %v717
          %v719 = vpop.f32.mrb[0].mxu0
          %v720 = vadd.f32 %v580, %v719
          %v721 = vpop.f32.mrb[0].mxu0
          %v722 = vadd.f32 %v576, %v721
          %v723 = vpop.f32.mrb[0].mxu0
          %v724 = vadd.f32 %v580, %v723
          %725 = vmatprep.mubr.bf16.mxu0 0
          %726 = vmatmul.mubr.bf16.gmra.mrb[0].mxu0 %v545
          %v727 = vpop.f32.mrb[0].mxu0
          %v728 = vadd.f32 %v576, %v727
          %v729 = vpop.f32.mrb[0].mxu0
          %v730 = vadd.f32 %v580, %v729
          %v731 = vpop.f32.mrb[0].mxu0
          %v732 = vadd.f32 %v576, %v731
          %v733 = vpop.f32.mrb[0].mxu0
          %v734 = vadd.f32 %v580, %v733
          %735 = vmatprep.mubr.bf16.mxu0 0
          %736 = vmatmul.mubr.bf16.gmra.mrb[0].mxu0 %v546
          %v737 = vpop.f32.mrb[0].mxu0
          %v738 = vadd.f32 %v576, %v737
          %v739 = vpop.f32.mrb[0].mxu0
          %v740 = vadd.f32 %v580, %v739
          %v741 = vpop.f32.mrb[0].mxu0
          %v742 = vadd.f32 %v576, %v741
          %v743 = vpop.f32.mrb[0].mxu0
          %v744 = vadd.f32 %v580, %v743
          %745 = vmatprep.mubr.bf16.mxu0 0
          %746 = vmatmul.mubr.bf16.gmra.mrb[0].mxu0 %v547
          %v747 = vpop.f32.mrb[0].mxu0
          %v748 = vadd.f32 %v576, %v747
          %v749 = vpop.f32.mrb[0].mxu0
          %v750 = vadd.f32 %v580, %v749
          %v751 = vpop.f32.mrb[0].mxu0
          %v752 = vadd.f32 %v576, %v751
          %v753 = vpop.f32.mrb[0].mxu0
          %v754 = vadd.f32 %v580, %v753
          %755 = vmatprep.mubr.bf16.mxu0 0
          %756 = vmatmul.mubr.bf16.gmra.mrb[0].mxu0 %v548
          %v757 = vpop.f32.mrb[0].mxu0
          %v758 = vadd.f32 %v576, %v757
          %v759 = vpop.f32.mrb[0].mxu0
          %v760 = vadd.f32 %v580, %v759
          %v761 = vpop.f32.mrb[0].mxu0
          %v762 = vadd.f32 %v576, %v761
          %v763 = vpop.f32.mrb[0].mxu0
          %v764 = vadd.f32 %v580, %v763
          %765 = vmatprep.mubr.bf16.mxu0 0
          %766 = vmatmul.mubr.bf16.gmra.mrb[0].mxu0 %v549
          %v767 = vpop.f32.mrb[0].mxu0
          %v768 = vadd.f32 %v576, %v767
          %v769 = vpop.f32.mrb[0].mxu0
          %v770 = vadd.f32 %v580, %v769
          %v771 = vpop.f32.mrb[0].mxu0
          %v772 = vadd.f32 %v576, %v771
          %v773 = vpop.f32.mrb[0].mxu0
          %v774 = vadd.f32 %v580, %v773
          %775 = vdwg.mxu0
          %v776 = vtanh.pop %v698
          %v777 = vtanh.pop %v702
          %v778 = vtanh.pop %v708
          %v779 = vtanh.pop %v712
          %v780 = vtanh.pop %v718
          %v781 = vtanh.pop %v722
          %v782 = vtanh.pop %v728
          %v783 = vtanh.pop %v732
          %v784 = vtanh.pop %v738
          %v785 = vtanh.pop %v742
          %v786 = vtanh.pop %v748
          %v787 = vtanh.pop %v752
          %v788 = vtanh.pop %v758
          %v789 = vtanh.pop %v762
          %v790 = vtanh.pop %v768
          %v791 = vtanh.pop %v772
          %v792 = vmul.f32 %v776, 2.0
          %v793 = vmul.f32 %v777, 2.0
          %v794 = vmul.f32 %v778, 2.0
          %v795 = vmul.f32 %v779, 2.0
          %v796 = vmul.f32 %v780, 2.0
          %v797 = vmul.f32 %v781, 2.0
          %v798 = vmul.f32 %v782, 2.0
          %v799 = vmul.f32 %v783, 2.0
          %v800 = vmul.f32 %v784, 2.0
          %v801 = vmul.f32 %v785, 2.0
          %v802 = vmul.f32 %v786, 2.0
          %v803 = vmul.f32 %v787, 2.0
          %v804 = vmul.f32 %v788, 2.0
          %v805 = vmul.f32 %v789, 2.0
          %v806 = vmul.f32 %v790, 2.0
          %v807 = vmul.f32 %v791, 2.0
          %v808 = vmul.f32 %v792, 1.442695
          %v809 = vpow.pop %v808
          %v810 = vmul.f32 %v793, 1.442695
          %v811 = vpow.pop %v810
          %v812 = vmul.f32 %v794, 1.442695
          %v813 = vpow.pop %v812
          %v814 = vmul.f32 %v795, 1.442695
          %v815 = vpow.pop %v814
          %v816 = vmul.f32 %v796, 1.442695
          %v817 = vpow.pop %v816
          %v818 = vmul.f32 %v797, 1.442695
          %v819 = vpow.pop %v818
          %v820 = vmul.f32 %v798, 1.442695
          %v821 = vpow.pop %v820
          %v822 = vmul.f32 %v799, 1.442695
          %v823 = vpow.pop %v822
          %v824 = vmul.f32 %v800, 1.442695
          %v825 = vpow.pop %v824
          %v826 = vmul.f32 %v801, 1.442695
          %v827 = vpow.pop %v826
          %v828 = vmul.f32 %v802, 1.442695
          %v829 = vpow.pop %v828
          %v830 = vmul.f32 %v803, 1.442695
          %v831 = vpow.pop %v830
          %v832 = vmul.f32 %v804, 1.442695
          %v833 = vpow.pop %v832
          %v834 = vmul.f32 %v805, 1.442695
          %v835 = vpow.pop %v834
          %v836 = vmul.f32 %v806, 1.442695
          %v837 = vpow.pop %v836
          %v838 = vmul.f32 %v807, 1.442695
          %v839 = vpow.pop %v838
          %v840 = vmul.f32 %v330, %v809
          %v841 = vmul.f32 %v331, %v811
          %v842 = vmul.f32 %v332, %v813
          %v843 = vmul.f32 %v333, %v815
          %v844 = vmul.f32 %v334, %v817
          %v845 = vmul.f32 %v335, %v819
          %v846 = vmul.f32 %v336, %v821
          %v847 = vmul.f32 %v337, %v823
          %v848 = vmul.f32 %v338, %v825
          %v849 = vmul.f32 %v339, %v827
          %v850 = vmul.f32 %v340, %v829
          %v851 = vmul.f32 %v341, %v831
          %v852 = vmul.f32 %v342, %v833
          %v853 = vmul.f32 %v343, %v835
          %v854 = vmul.f32 %v344, %v837
          %v855 = vmul.f32 %v345, %v839
          %v856 = vadd.f32 %v840, %v700
          %v857 = vadd.f32 %v841, %v704
          %v858 = vadd.f32 %v842, %v710
          %v859 = vadd.f32 %v843, %v714
          %v860 = vadd.f32 %v844, %v720
          %v861 = vadd.f32 %v845, %v724
          %v862 = vadd.f32 %v846, %v730
          %v863 = vadd.f32 %v847, %v734
          %v864 = vadd.f32 %v848, %v740
          %v865 = vadd.f32 %v849, %v744
          %v866 = vadd.f32 %v850, %v750
          %v867 = vadd.f32 %v851, %v754
          %v868 = vadd.f32 %v852, %v760
          %v869 = vadd.f32 %v853, %v764
          %v870 = vadd.f32 %v854, %v770
          %v871 = vadd.f32 %v855, %v774
        $region57: #{tpu_custom_call.1} parent=39 // loop_footer
          %s313 = sadd.s32 1, %s309
        $region58: #{tpu_custom_call.1} parent=39 // loop_footer_branch
          %308 = sbr.rel target = $region54
        $region59: #{tpu_custom_call.1} parent=39 // loop_exit
          _
        %872 = vst [vmem:[%s272] sm:$0xff] %v314
        %873 = vst [vmem:[%s272 + $0x10] sm:$0xff] %v315
        %874 = vst [vmem:[%s272 + $0x20] sm:$0xff] %v316
        %875 = vst [vmem:[%s272 + $0x30] sm:$0xff] %v317
        %876 = vst [vmem:[%s272 + $0x40] sm:$0xff] %v318
        %877 = vst [vmem:[%s272 + $0x50] sm:$0xff] %v319
        %878 = vst [vmem:[%s272 + $0x60] sm:$0xff] %v320
        %879 = vst [vmem:[%s272 + $0x70] sm:$0xff] %v321
        %880 = vst [vmem:[%s272 + $0x80] sm:$0xff] %v322
        %881 = vst [vmem:[%s272 + $0x90] sm:$0xff] %v323
        %882 = vst [vmem:[%s272 + $0xa0] sm:$0xff] %v324
        %883 = vst [vmem:[%s272 + $0xb0] sm:$0xff] %v325
        %884 = vst [vmem:[%s272 + $0xc0] sm:$0xff] %v326
        %885 = vst [vmem:[%s272 + $0xd0] sm:$0xff] %v327
        %886 = vst [vmem:[%s272 + $0xe0] sm:$0xff] %v328
        %887 = vst [vmem:[%s272 + $0xf0] sm:$0xff] %v329
        %888 = vst [vmem:[%s272 + $0x8] sm:$0xff] %v330
        %889 = vst [vmem:[%s272 + $0x18] sm:$0xff] %v331
        %890 = vst [vmem:[%s272 + $0x28] sm:$0xff] %v332
        %891 = vst [vmem:[%s272 + $0x38] sm:$0xff] %v333
        %892 = vst [vmem:[%s272 + $0x48] sm:$0xff] %v334
        %893 = vst [vmem:[%s272 + $0x58] sm:$0xff] %v335
        %894 = vst [vmem:[%s272 + $0x68] sm:$0xff] %v336
        %895 = vst [vmem:[%s272 + $0x78] sm:$0xff] %v337
        %896 = vst [vmem:[%s272 + $0x88] sm:$0xff] %v338
        %897 = vst [vmem:[%s272 + $0x98] sm:$0xff] %v339
        %898 = vst [vmem:[%s272 + $0xa8] sm:$0xff] %v340
        %899 = vst [vmem:[%s272 + $0xb8] sm:$0xff] %v341
        %900 = vst [vmem:[%s272 + $0xc8] sm:$0xff] %v342
        %901 = vst [vmem:[%s272 + $0xd8] sm:$0xff] %v343
        %902 = vst [vmem:[%s272 + $0xe8] sm:$0xff] %v344
        %903 = vst [vmem:[%s272 + $0xf8] sm:$0xff] %v345
        %s904 = sand.u32 %s141, 1
        %s905 = scalar_lea.sflag [#allocation4], %s904
        %s906 = sand.u32 %s141, 1
        %s907 = smul.addr %s906, 256
        %s908 = scalar_lea.vmem [#allocation8], %s907
        // Predicated region
        $region60: #{tpu_custom_call.1} parent=39 // pred_check
          %p909 = pneg %p151
        $region61: #{tpu_custom_call.1} parent=39 // pred_check_branch
          %911 = sbr.rel (%p909) target = $region63
        $region62: #{tpu_custom_call.1} parent=39 // pred_region
          %s912 = smul.u32 16, %s23
          %s914 = ssub.s32 4096, 4096
          %915 = vsyncadd %s905, %s914
          %s916 = smul.addr %s912, 2
          %s917 = smul.addr %s916, 128
          %s918 = scalar_lea.hbm %s5, %s917
          %s919 = sshll.u32 %s908, 4
          %s920 = int_to_ptr.vmem [resolvable:$true] %s919
          %925 = dma.vmem_to_hbm [thread:$0]  %s920, 4096, %s918, %s905, 256, 256, 16
        $region63: #{tpu_custom_call.1} parent=39 // pred_fallthru
          _
      $region40: #{tpu_custom_call.1} parent=5 // pred_fallthru
        _
      %p926 = scmp.le.s32.totalorder 2, %s18
      // Predicated region
      $region64: #{tpu_custom_call.1} parent=5 // pred_check
        %p927 = pneg %p926
      $region65: #{tpu_custom_call.1} parent=5 // pred_check_branch
        %929 = sbr.rel (%p927) target = $region67
      $region66: #{tpu_custom_call.1} parent=5 // pred_region
        %s930 = ssub.s32 %s18, 2
        // Predicated region
        $region68: #{tpu_custom_call.1} parent=66 // pred_check
          %p931 = pneg %p157
        $region69: #{tpu_custom_call.1} parent=66 // pred_check_branch
          %933 = sbr.rel (%p931) target = $region71
        $region70: #{tpu_custom_call.1} parent=66 // pred_region
          %s934 = sand.u32 %s142, 1
          %s935 = scalar_lea.sflag [#allocation4], %s934
          %s936 = sand.u32 %s142, 1
          %s937 = smul.addr %s936, 256
          %s938 = scalar_lea.vmem [#allocation8], %s937
          %939 = dma.done %s935, 4096
        $region71: #{tpu_custom_call.1} parent=66 // pred_fallthru
          _
      $region67: #{tpu_custom_call.1} parent=5 // pred_fallthru
        _
    $region6: #{tpu_custom_call.1} parent=1 // loop_footer
      %s22 = sadd.s32 1, %s18
    $region7: #{tpu_custom_call.1} parent=1 // loop_footer_branch
      %17 = sbr.rel target = $region3
    $region8: #{tpu_custom_call.1} parent=1 // loop_exit
      _
    %940 = vsyncpa [#allocation3], 1
    %s941 = scalar_lea.sflag [#allocation3], 1
    %942 = vsyncpa %s941, 1
    %943 = vsyncpa [#allocation6], 1
    %944 = vsyncpa [#allocation4], 1
    %s945 = scalar_lea.sflag [#allocation4], 1
    %946 = vsyncpa %s945, 1

</llo_original>
